<compile_context>
chip_gen: v7x
topology: tpu7x:2x2x1
jax: 0.10.0
libtpu: 0.0.40
codegen_flags: <defaults>
</compile_context>

<pallas_src>
import functools

import jax
import jax.numpy as jnp
from jax import lax
from jax.experimental import pallas as pl
from jax.experimental.pallas import tpu as pltpu


def _round_up(x, m):
    return ((x + m - 1) // m) * m


def _chip_info():
    """(num_tensorcores_per_chip, vmem_bytes). Conservative fallbacks."""
    kind = ""
    try:
        kind = jax.devices()[0].device_kind.lower()
    except Exception:
        pass
    vmem = None
    try:
        info = pltpu.get_tpu_info()
        cap = getattr(info, "vmem_capacity_bytes", None)
        if cap:
            vmem = int(cap)
    except Exception:
        vmem = None
    if vmem is None:
        # v7x has 64 MiB VMEM per TC; v5e/v6e have 128 MiB.
        vmem = (64 << 20) if "7" in kind else (128 << 20)
    num_tc = 2 if "7" in kind else 1  # v7x: 2 TCs/chip; v5e/v6e: 1 (perf-only hint)
    return num_tc, vmem


def _vmem_limit(block_bytes, vmem_bytes):
    return int(max(16 << 20,
                   min(vmem_bytes - (16 << 20), max(32 << 20, 6 * block_bytes))))


def _auto_block_rows(batch, n_cols, itemsize, sublane, num_tc, budget):
    """Largest legal row block that fits `budget` (4 live tiles: in+out, x2 buf).

    Returns 0 when even a minimal (sublane-high, full-width) block does not fit,
    signalling the feature-axis-tiled two-pass path.
    """
    per_row = n_cols * itemsize
    rows = budget // (4 * per_row)
    if rows < min(batch, sublane):
        return 0
    if num_tc >= 2 and batch >= 2 * sublane:
        # v7x: guarantee >= 2 "parallel" grid steps so both TensorCores work.
        rows = min(rows, _round_up(pl.cdiv(batch, 2), sublane))
    if rows >= batch:
        return batch                       # single full-extent block, no padding
    rows = max(sublane, (rows // sublane) * sublane)
    # Rebalance so the last block is nearly full instead of mostly padding.
    nsteps = pl.cdiv(batch, rows)
    return _round_up(pl.cdiv(batch, nsteps), sublane)


def _validate_rows(block_rows, batch, sublane):
    br = min(int(block_rows), batch)
    if br < batch:
        br = max(sublane, _round_up(br, sublane))
        if br >= batch:
            br = batch
    return max(1, br)


# ----------------------------- kernels ------------------------------------


def _secureml_softmax_kernel(x_ref, o_ref, *, inv_n):
    # Whole (block_rows, N) tile resident in VMEM; reduce over the lane axis.
    x = x_ref[...]
    relu_x = jnp.maximum(x, 0)                           # native dtype
    s = jnp.sum(relu_x.astype(jnp.float32), axis=1, keepdims=True)  # f32 accum
    inv = pl.reciprocal(jnp.where(s > 0, s, 1.0), approx=False)
    out = jnp.where(s > 0, relu_x.astype(jnp.float32) * inv, jnp.float32(inv_n))
    o_ref[...] = out.astype(o_ref.dtype)


def _row_sum_kernel(x_ref, s_ref, *, n_cols, block_cols):
    # Pass 1 of the wide-row path: accumulate per-row ReLU sums over col blocks.
    j = pl.program_id(1)

    @pl.when(j == 0)
    def _():
        s_ref[...] = jnp.zeros_like(s_ref)

    x = x_ref[...].astype(jnp.float32)
    col = lax.broadcasted_iota(jnp.int32, x.shape, 1) + j * block_cols
    relu_x = jnp.where(col < n_cols, jnp.maximum(x, 0.0), 0.0)  # mask OOB cols
    s_ref[...] += jnp.sum(relu_x, axis=1, keepdims=True)


def _normalize_kernel(x_ref, s_ref, o_ref, *, inv_n):
    # Pass 2 of the wide-row path: normalize each column block by the row sum.
    x = x_ref[...].astype(jnp.float32)
    relu_x = jnp.maximum(x, 0.0)
    s = s_ref[...]
    inv = pl.reciprocal(jnp.where(s > 0, s, 1.0), approx=False)
    out = jnp.where(s > 0, relu_x * inv, jnp.float32(inv_n))
    o_ref[...] = out.astype(o_ref.dtype)


# ----------------------------- wrappers ------------------------------------


def _xla_impl(x):
    xf = x.astype(jnp.float32)
    relu = jnp.maximum(xf, 0.0)
    s = jnp.sum(relu, axis=1, keepdims=True)
    out = jnp.where(s > 0, (1.0 / s) * relu, jnp.float32(1.0 / x.shape[1]))
    return out.astype(x.dtype)


def _single_pass(x, br, inv_n, vmem_bytes):
    B, N = x.shape
    block_bytes = br * N * jnp.dtype(x.dtype).itemsize
    return pl.pallas_call(
        functools.partial(_secureml_softmax_kernel, inv_n=inv_n),
        out_shape=jax.ShapeDtypeStruct((B, N), x.dtype),
        grid=(pl.cdiv(B, br),),
        in_specs=[pl.BlockSpec((br, N), lambda i: (i, 0))],
        out_specs=pl.BlockSpec((br, N), lambda i: (i, 0)),
        compiler_params=pltpu.CompilerParams(
            dimension_semantics=("parallel",),
            vmem_limit_bytes=_vmem_limit(block_bytes, vmem_bytes),
        ),
    )(x)


def _two_pass(x, br, bc, inv_n, vmem_bytes):
    B, N = x.shape
    itemsize = jnp.dtype(x.dtype).itemsize
    vlim = _vmem_limit(br * bc * itemsize, vmem_bytes)
    grid = (pl.cdiv(B, br), pl.cdiv(N, bc))
    # Pass 1: per-row sum of ReLU, accumulated across feature blocks.
    s = pl.pallas_call(
        functools.partial(_row_sum_kernel, n_cols=N, block_cols=bc),
        out_shape=jax.ShapeDtypeStruct((B, 1), jnp.float32),
        grid=grid,
        in_specs=[pl.BlockSpec((br, bc), lambda i, j: (i, j))],
        out_specs=pl.BlockSpec((br, 1), lambda i, j: (i, 0)),
        compiler_params=pltpu.CompilerParams(
            dimension_semantics=("parallel", "arbitrary"),
            vmem_limit_bytes=vlim,
        ),
    )(x)
    # Pass 2: normalize each feature block with the per-row sum.
    return pl.pallas_call(
        functools.partial(_normalize_kernel, inv_n=inv_n),
        out_shape=jax.ShapeDtypeStruct((B, N), x.dtype),
        grid=grid,
        in_specs=[pl.BlockSpec((br, bc), lambda i, j: (i, j)),
                  pl.BlockSpec((br, 1), lambda i, j: (i, 0))],
        out_specs=pl.BlockSpec((br, bc), lambda i, j: (i, j)),
        compiler_params=pltpu.CompilerParams(
            dimension_semantics=("parallel", "parallel"),
            vmem_limit_bytes=vlim,
        ),
    )(x, s)


def secureml_softmax(x, *, block_rows=None, block_cols=None,
                     allow_xla_fallback=True):
    """x: (B, N) float array. Returns SecureML softmax of x (same shape/dtype)."""
    B, N = x.shape
    if N == 0:
        raise ValueError("SecureML_softmax requires at least one feature (N > 0).")
    dtype = x.dtype
    itemsize = jnp.dtype(dtype).itemsize
    inv_n = 1.0 / N

    # Tiny inputs: one fused XLA pass beats the pallas_call fixed cost.
    if (allow_xla_fallback and block_rows is None and block_cols is None
            and x.size * itemsize < (256 << 10)):
        return _xla_impl(x)

    sublane = max(8, 32 // itemsize)            # 8 for f32, 16 for bf16
    num_tc, vmem_bytes = _chip_info()
    budget = min(vmem_bytes // 4, 32 << 20)     # bytes for the 4 live tiles

    auto_br = None
    if block_rows is None:
        auto_br = _auto_block_rows(B, N, itemsize, sublane, num_tc, budget)

    needs_col_tiling = (block_cols is not None) or \
                       (block_rows is None and auto_br == 0)

    if not needs_col_tiling:
        br = auto_br if block_rows is None else _validate_rows(block_rows, B, sublane)
        return _single_pass(x, br, inv_n, vmem_bytes)

    # ---- feature-axis-tiled two-pass fallback (very wide rows) ----
    if block_rows is not None:
        br = _validate_rows(block_rows, B, sublane)
    else:
        br = B if B <= 64 else 64
    if block_cols is not None:
        bc = N if int(block_cols) >= N else max(128, (int(block_cols) // 128) * 128)
    else:
        bc = budget // (4 * br * itemsize)
        bc = N if bc >= N else max(128, (bc // 128) * 128)
    return _two_pass(x, br, bc, inv_n, vmem_bytes)


def _reference(x):
    x = x.astype(jnp.float32)
    relu_x = jnp.maximum(x, 0.0)
    s = jnp.sum(relu_x, axis=1, keepdims=True)
    L = 1.0 / x.shape[1]
    return jnp.where(s > 0, (1.0 / s) * relu_x, L)


if __name__ == "__main__":
    key = jax.random.PRNGKey(0)

    # Primary test: small shape consistent with the module's forward (B, N).
    B, N = 16, 32
    x = jax.random.normal(key, (B, N), dtype=jnp.float32)
    # Make one row entirely non-positive so the `s <= 0 -> L` branch is exercised.
    x = x.at[3].set(-jnp.abs(x[3]))
    out = jax.block_until_ready(secureml_softmax(x, allow_xla_fallback=False))
    ref = _reference(x)
    assert out.shape == (B, N)
    assert jnp.allclose(out, ref, atol=1e-6, rtol=1e-6), "mismatch vs reference"

    # Ragged batch + non-128 feature count, single-pass full-extent-N path.
    B2, N2 = 13, 200
    x2 = jax.random.normal(jax.random.PRNGKey(1), (B2, N2), dtype=jnp.float32)
    x2 = x2.at[0].set(-jnp.abs(x2[0]))
    out2 = jax.block_until_ready(secureml_softmax(x2, allow_xla_fallback=False))
    assert out2.shape == (B2, N2)
    assert jnp.allclose(out2, _reference(x2), atol=1e-6, rtol=1e-6), "ragged mismatch"

    # Multiple row blocks with an overhanging (ragged) last block, no wrapper pad.
    B3, N3 = 300, 256
    x3 = jax.random.normal(jax.random.PRNGKey(2), (B3, N3), dtype=jnp.float32)
    x3 = x3.at[7].set(-jnp.abs(x3[7]))
    out3 = jax.block_until_ready(
        secureml_softmax(x3, block_rows=128, allow_xla_fallback=False))
    assert jnp.allclose(out3, _reference(x3), atol=1e-6, rtol=1e-6), "multi-block mismatch"

    # Force the feature-axis-tiled two-pass path (wide-row fallback) at small N.
    out4 = jax.block_until_ready(
        secureml_softmax(x2, block_cols=128, allow_xla_fallback=False))
    assert jnp.allclose(out4, _reference(x2), atol=1e-6, rtol=1e-6), "two-pass mismatch"

    # Tiny-input XLA fallback path.
    out5 = jax.block_until_ready(secureml_softmax(x))
    assert jnp.allclose(out5, ref, atol=1e-6, rtol=1e-6), "fallback mismatch"

    print("KERNEL_OK")
</pallas_src>

<mosaic_0001>
module attributes {stable_mosaic.version = 11 : i64} {
  func.func @_secureml_softmax_kernel(%arg0: i32, %arg1: memref<16x32xf32, #tpu.memory_space<vmem>>, %arg2: memref<16x32xf32, #tpu.memory_space<vmem>>) attributes {dimension_semantics = [#tpu.dimension_semantics<parallel>], iteration_bounds = array<i64: 1>, scalar_prefetch = 0 : i64, scratch_operands = 0 : i64, tpu.core_type = #tpu.core_type<tc>, window_params = [{transform_indices = @transform_0, window_bounds = array<i64: 16, 32>}, {transform_indices = @transform_1, window_bounds = array<i64: 16, 32>}]} {
    %c0 = arith.constant 0 : index
    %c0_0 = arith.constant 0 : index
    %0 = vector.load %arg1[%c0, %c0_0] : memref<16x32xf32, #tpu.memory_space<vmem>>, vector<16x32xf32>
    %cst = arith.constant 0.000000e+00 : f32
    %1 = vector.broadcast %cst : f32 to vector<16x32xf32>
    %2 = arith.maximumf %0, %1 : vector<16x32xf32>
    %cst_1 = arith.constant dense<0.000000e+00> : vector<16xf32>
    %3 = vector.multi_reduction <add>, %2, %cst_1 [1] : vector<16x32xf32> to vector<16xf32>
    %4 = vector.shape_cast %3 : vector<16xf32> to vector<16x1xf32>
    %cst_2 = arith.constant 0.000000e+00 : f32
    %5 = vector.broadcast %cst_2 : f32 to vector<16x1xf32>
    %6 = arith.cmpf ogt, %4, %5 : vector<16x1xf32>
    %cst_3 = arith.constant 1.000000e+00 : f32
    %7 = vector.broadcast %cst_3 : f32 to vector<16x1xf32>
    %8 = arith.select %6, %4, %7 : vector<16x1xi1>, vector<16x1xf32>
    %9 = tpu.reciprocal %8 : vector<16x1xf32> -> vector<16x1xf32>
    %cst_4 = arith.constant 0.000000e+00 : f32
    %10 = vector.broadcast %cst_4 : f32 to vector<16x1xf32>
    %11 = arith.cmpf ogt, %4, %10 : vector<16x1xf32>
    %12 = vector.broadcast %9 : vector<16x1xf32> to vector<16x32xf32>
    %13 = arith.mulf %2, %12 : vector<16x32xf32>
    %cst_5 = arith.constant 3.125000e-02 : f32
    %14 = vector.shape_cast %11 : vector<16x1xi1> to vector<16x1xi1>
    %15 = vector.broadcast %14 : vector<16x1xi1> to vector<16x32xi1>
    %16 = vector.broadcast %cst_5 : f32 to vector<16x32xf32>
    %17 = arith.select %15, %13, %16 : vector<16x32xi1>, vector<16x32xf32>
    %c0_6 = arith.constant 0 : index
    %c0_7 = arith.constant 0 : index
    %18 = vector.load %arg2[%c0_6, %c0_7] : memref<16x32xf32, #tpu.memory_space<vmem>>, vector<16x32xf32>
    tpu.vector_store %arg2[%c0_6, %c0_7], %17 {strides = array<i32>} : memref<16x32xf32, #tpu.memory_space<vmem>>, vector<16x32xf32>,
    return
  }
  func.func @transform_0(%arg0: i32) -> (i32, i32) {
    %c0_i32 = arith.constant 0 : i32
    %c0_i32_0 = arith.constant 0 : i32
    return %arg0, %c0_i32 : i32, i32
  }
  func.func @transform_1(%arg0: i32) -> (i32, i32) {
    %c0_i32 = arith.constant 0 : i32
    %c0_i32_0 = arith.constant 0 : i32
    return %arg0, %c0_i32 : i32, i32
  }
}

</mosaic_0001>

<llo_original>
// kernel: tpu_custom_call.1
$region0: #{tpu_custom_call.1}
  #allocation0 [shape = 'u32[]', space=smem, size = 0x4, offset = 0x4, fixed_abs, tag = 'smem constant byte address 0x4 - core index']
  #allocation1 [shape = 'u32[144,128]{1,0:T(1,128)}', space=vmem, size = 0x12000, scoped, tag = 'internal scratch']
  %s0 = inlined_call_operand.hbm [shape: f32[16,32], index: 0, kind: input, shape index: {}]
  %s1 = inlined_call_operand.hbm [shape: f32[16,32], index: 1, kind: output, shape index: {}]
  %s2 = sld [smem:[#allocation0]]
  $region18: #{tpu_custom_call.1} parent=0
    _
  %s4 = ssub.s32 1, %s2
  %s5 = scalar_select 0, %s4, %s2
  $region1: #{tpu_custom_call.1} parent=0
    #allocation2 [shape = 'u8[8192]{0}', space=vmem, size = 0x2000, scoped, tag = 'input window, operand 0, single buffered']
    #allocation3 [shape = 's32[1]{0}', space=sflag, size = 0x4, scoped, tag = 'scoped memory for tpu_custom_call.1']
    #allocation4 [shape = 's32[1]{0}', space=sflag, size = 0x4, scoped, tag = 'scoped memory for tpu_custom_call.1']
    #allocation5 [shape = 'u8[8192]{0}', space=vmem, size = 0x2000, scoped, tag = 'output window, operand 0, single buffered']
    %6 = vsyncpa [#allocation3], 0
    %7 = vsyncpa [#allocation4], 0
    // Predicated region
    $region2: #{tpu_custom_call.1} parent=1 // pred_check
      _
    $region3: #{tpu_custom_call.1} parent=1 // pred_check_branch
      %9 = sbr.rel (0) target = $region5
    $region4: #{tpu_custom_call.1} parent=1 // pred_region
      %s11 = ssub.s32 256, 256
      %12 = vsyncadd [#allocation3], %s11
      %s13 = sshll.u32 [#allocation2], 4
      %s14 = int_to_ptr.vmem [resolvable:$true] %s13
      %19 = dma.hbm_to_vmem [thread:$0]  %s0, 256, %s14, [#allocation3], 128, 128, 8
    $region5: #{tpu_custom_call.1} parent=1 // pred_fallthru
      _
    // Predicated region
    $region6: #{tpu_custom_call.1} parent=1 // pred_check
      _
    $region7: #{tpu_custom_call.1} parent=1 // pred_check_branch
      %21 = sbr.rel (0) target = $region9
    $region8: #{tpu_custom_call.1} parent=1 // pred_region
      %22 = dma.done [#allocation3], 256
    $region9: #{tpu_custom_call.1} parent=1 // pred_fallthru
      _
    %v23 = vld [vmem:[#allocation2] sm:$0xff]
    %v24 = vld [vmem:[#allocation2 + $0x8] sm:$0xff]
    %v25 = vmax.f32 %v23, 0.0
    %v26 = vmax.f32 %v24, 0.0
    %vm27 = vcmask 261120
    %v28 = vsel %vm27, %v25, 0.0
    %29 = vadd.xlane.f32.xlu0 %v28
    %v30 = vpop.xlane.xlu0 %29
    %v31 = vsel %vm27, %v26, 0.0
    %32 = vadd.xlane.f32.xlu0 %v31
    %v33 = vpop.xlane.xlu0 %32
    %vm34 = vcmp.gt.f32.partialorder %v30, 0.0
    %vm35 = vcmp.gt.f32.partialorder %v33, 0.0
    %v36 = vsel %vm34, %v30, 1.0
    %v37 = vsel %vm35, %v33, 1.0
    %v38 = vrcp.pop %v36
    %v39 = vrcp.pop %v37
    %v40 = vmul.f32 %v25, %v38
    %v41 = vmul.f32 %v26, %v39
    %v42 = vsel %vm34, 1, 0
    %v43 = vsel %vm35, 1, 0
    %vm44 = vcmp.eq.s32.totalorder %v42, 1
    %vm45 = vcmp.eq.s32.totalorder %v43, 1
    %v46 = vsel %vm44, %v40, 0.03125
    %v47 = vsel %vm45, %v41, 0.03125
    %48 = vst.msk [vmem:[#allocation5] sm:$0xff] %vm27, %v46
    %49 = vst.msk [vmem:[#allocation5 + $0x8] sm:$0xff] %vm27, %v47
    // Predicated region
    $region10: #{tpu_custom_call.1} parent=1 // pred_check
      _
    $region11: #{tpu_custom_call.1} parent=1 // pred_check_branch
      %51 = sbr.rel (0) target = $region13
    $region12: #{tpu_custom_call.1} parent=1 // pred_region
      %s53 = ssub.s32 256, 256
      %54 = vsyncadd [#allocation4], %s53
      %s55 = sshll.u32 [#allocation5], 4
      %s56 = int_to_ptr.vmem [resolvable:$true] %s55
      %61 = dma.vmem_to_hbm [thread:$0]  %s56, 256, %s1, [#allocation4], 128, 128, 8
    $region13: #{tpu_custom_call.1} parent=1 // pred_fallthru
      _
    // Predicated region
    $region14: #{tpu_custom_call.1} parent=1 // pred_check
      _
    $region15: #{tpu_custom_call.1} parent=1 // pred_check_branch
      %63 = sbr.rel (0) target = $region17
    $region16: #{tpu_custom_call.1} parent=1 // pred_region
      %64 = dma.done [#allocation4], 256
    $region17: #{tpu_custom_call.1} parent=1 // pred_fallthru
      _
    %65 = vsyncpa [#allocation3], 1
    %66 = vsyncpa [#allocation4], 1

</llo_original>
